<compile_context>
chip_gen: v7x
topology: tpu7x:2x2x1
jax: 0.10.0
libtpu: 0.0.40
codegen_flags: <defaults>
</compile_context>

<pallas_src>
import functools

import jax
import jax.numpy as jnp
from jax.experimental import pallas as pl
from jax.experimental.pallas import tpu as pltpu


# ----------------------------------------------------------------------------
# Shared helpers.
# ----------------------------------------------------------------------------
def _gate_split(gates, H):
    i = jax.nn.sigmoid(gates[:, 0 * H:1 * H])
    f = jax.nn.sigmoid(gates[:, 1 * H:2 * H])
    g = jnp.tanh(gates[:, 2 * H:3 * H])
    o = jax.nn.sigmoid(gates[:, 3 * H:4 * H])
    return i, f, g, o


def _lstm_cell(xcat_bf16, c, w_ref, b_ref, H):
    """Fused cell for the single-step kernel: one K=2H matmul per cell."""
    gates = jnp.dot(xcat_bf16, w_ref[...],
                    preferred_element_type=jnp.float32) + b_ref[...]
    i, f, g, o = _gate_split(gates, H)
    c_new = f * c + i * g
    h_new = o * jnp.tanh(c_new)
    return h_new, c_new


# ----------------------------------------------------------------------------
# Kernel 1: single step (exact module forward signature / semantics).
# NOTE: per-call weight DMA dominates at B=2 — use rudder_lstm_sequence for
# any repeated-step workload.
# ----------------------------------------------------------------------------
def rudder_step_kernel(x_ref, h1_ref, c1_ref, h2_ref, c2_ref,
                       w1_ref, b1_ref, w2_ref, b2_ref, wl_ref, bl_ref,
                       out_ref, h1o_ref, c1o_ref, h2o_ref, c2o_ref):
    H = h1_ref.shape[1]

    xin1 = jnp.concatenate([x_ref[...], h1_ref[...]], axis=-1).astype(jnp.bfloat16)
    h1_t, c1_t = _lstm_cell(xin1, c1_ref[...], w1_ref, b1_ref, H)

    xin2 = jnp.concatenate([h1_t, h2_ref[...]], axis=-1).astype(jnp.bfloat16)
    h2_t, c2_t = _lstm_cell(xin2, c2_ref[...], w2_ref, b2_ref, H)

    # Output linear as VPU multiply + lane reduction (wl stored as (1, H) row).
    out_ref[...] = jnp.sum(h2_t * wl_ref[...], axis=-1, keepdims=True) + bl_ref[...]
    h1o_ref[...] = h1_t
    c1o_ref[...] = c1_t
    h2o_ref[...] = h2_t
    c2o_ref[...] = c2_t


def rudder_lstm_forward(packed, action_hot, state_hot, time_tri, h1, c1, h2, c2):
    """Single step, same semantics as RudderLSTM.forward."""
    B = action_hot.shape[0]
    H = h1.shape[1]
    # Layout plumbing (no compute): concat the 3 raw inputs and zero-pad to H
    # lanes so the folded LSTM1 weight sees a 128-aligned input.
    x36 = jnp.concatenate([action_hot, state_hot, time_tri], axis=-1)
    x = jnp.pad(x36, ((0, 0), (0, H - x36.shape[1])))

    inputs = (x, h1, c1, h2, c2,
              packed["w1_step"], packed["b1"], packed["w2_step"], packed["b2"],
              packed["wl"], packed["bl"])
    out_shapes = (
        jax.ShapeDtypeStruct((B, 1), jnp.float32),   # output
        jax.ShapeDtypeStruct((B, H), jnp.float32),   # h1_t
        jax.ShapeDtypeStruct((B, H), jnp.float32),   # c1_t
        jax.ShapeDtypeStruct((B, H), jnp.float32),   # h2_t
        jax.ShapeDtypeStruct((B, H), jnp.float32),   # c2_t
    )
    vmem = lambda: pl.BlockSpec(memory_space=pltpu.MemorySpace.VMEM)
    return pl.pallas_call(
        rudder_step_kernel,
        out_shape=out_shapes,
        in_specs=[vmem() for _ in inputs],
        out_specs=tuple(vmem() for _ in out_shapes),
    )(*inputs)


# ----------------------------------------------------------------------------
# Kernel 2: full sequence, chunked time loop inside one pallas_call.
# grid=(T//TC,); weights resident in VMEM; h/c carried in resident output
# blocks; TC timesteps per grid step, statically unrolled.
# ----------------------------------------------------------------------------
def rudder_seq_kernel(gx_ref, h1i_ref, c1i_ref, h2i_ref, c2i_ref,
                      w1hh_ref, w2ih_ref, w2hh_ref, b2_ref, wl_ref, bl_ref,
                      out_ref, h1o_ref, c1o_ref, h2o_ref, c2o_ref,
                      h2hist_ref, *, time_chunk):
    B, H = h1i_ref.shape

    # INVARIANT: the h/c carry relies on these output blocks staying resident
    # across the sequential ("arbitrary") time-chunk axis (constant index_map
    # => single HBM writeback after the last grid step).  Do NOT mark the time
    # axis "parallel" or change the h/c output index_maps.
    @pl.when(pl.program_id(0) == 0)
    def _():
        h1o_ref[...] = h1i_ref[...]
        c1o_ref[...] = c1i_ref[...]
        h2o_ref[...] = h2i_ref[...]
        c2o_ref[...] = c2i_ref[...]

    # Hoisted bias broadcast (JAX does not CSE broadcast_in_dim in the
    # unrolled loop below).
    b2 = jnp.broadcast_to(b2_ref[...], (B, 4 * H))

    h1 = h1o_ref[...]
    c1 = c1o_ref[...]
    h2 = h2o_ref[...]
    c2 = c2o_ref[...]

    # Statically-unrolled time-chunk loop: small, fixed trip count; gives the
    # scheduler visibility to overlap adjacent steps' MXU / EUP / VPU work.
    for t in range(time_chunk):
        gx_t = gx_ref[t]                                   # (B, 4H) f32, x-path precomputed

        # h2_prev @ W2_hh is independent of cell 1 -> issue it early so the
        # MXU pass overlaps cell-1's sigmoid/tanh (EUP).
        g2h = jnp.dot(h2.astype(jnp.bfloat16), w2hh_ref[...],
                      preferred_element_type=jnp.float32)

        # Cell 1: single K=128 recurrent matmul (x contribution already in gx).
        g1 = gx_t + jnp.dot(h1.astype(jnp.bfloat16), w1hh_ref[...],
                            preferred_element_type=jnp.float32)
        i1, f1, gg1, o1 = _gate_split(g1, H)
        c1 = f1 * c1 + i1 * gg1
        h1 = o1 * jnp.tanh(c1)

        # Cell 2: remaining half of the split matmul.
        g2 = g2h + b2 + jnp.dot(h1.astype(jnp.bfloat16), w2ih_ref[...],
                                preferred_element_type=jnp.float32)
        i2, f2, gg2, o2 = _gate_split(g2, H)
        c2 = f2 * c2 + i2 * gg2
        h2 = o2 * jnp.tanh(c2)

        # Stage h2 for the batched per-chunk output linear.
        h2hist_ref[t] = h2

    # Final [H -> 1] linear, done once per chunk as a batched VPU
    # multiply + lane reduction; single store of the (TC, B) output block
    # => one HBM writeback per chunk instead of one tiny DMA per step.
    out_ref[...] = jnp.sum(h2hist_ref[...] * wl_ref[...], axis=-1) + bl_ref[...]

    h1o_ref[...] = h1
    c1o_ref[...] = c1
    h2o_ref[...] = h2
    c2o_ref[...] = c2


def _pick_time_chunk(T, want):
    """Largest divisor of T that is <= want and a multiple of 8 (or == T)."""
    want = max(1, min(want, T))
    for cand in range(want, 0, -1):
        if T % cand == 0 and (cand % 8 == 0 or cand == T):
            return cand
    return T


def _precompute_gates_x(packed, action_seq, state_seq, time_seq):
    """x-path (heads + rr + LSTM1 input weight + LSTM1 biases) for all T steps.

    One big parallel matmul in plain XLA, off the recurrence-critical path.
    """
    x36 = jnp.concatenate([action_seq, state_seq, time_seq], axis=-1)   # (T, B, 36)
    return jnp.einsum("tbi,ij->tbj", x36, packed["w1x"]) + packed["b1"]  # (T, B, 4H)


def rudder_lstm_sequence(packed, action_seq, state_seq, time_seq, h1, c1, h2, c2,
                         *, time_chunk=8):
    """Runs T RudderLSTM steps inside a single pallas_call. Inputs are (T, B, .)."""
    T, B = action_seq.shape[0], action_seq.shape[1]
    H = h1.shape[1]
    tc = _pick_time_chunk(T, time_chunk)

    gx = _precompute_gates_x(packed, action_seq, state_seq, time_seq)    # (T, B, 4H)

    inputs = (gx, h1, c1, h2, c2,
              packed["w1hh"], packed["w2ih"], packed["w2hh"],
              packed["b2"], packed["wl"], packed["bl"])

    out_shapes = (
        jax.ShapeDtypeStruct((T, B), jnp.float32),   # per-step output (lane-packed)
        jax.ShapeDtypeStruct((B, H), jnp.float32),   # final h1
        jax.ShapeDtypeStruct((B, H), jnp.float32),   # final c1
        jax.ShapeDtypeStruct((B, H), jnp.float32),   # final h2
        jax.ShapeDtypeStruct((B, H), jnp.float32),   # final c2
    )

    const2 = lambda t: (0, 0)
    in_specs = [
        pl.BlockSpec((tc, B, 4 * H), lambda t: (t, 0, 0)),   # gx chunk (streams per chunk)
        pl.BlockSpec((B, H), const2),                        # h1_0 (resident)
        pl.BlockSpec((B, H), const2),                        # c1_0
        pl.BlockSpec((B, H), const2),                        # h2_0
        pl.BlockSpec((B, H), const2),                        # c2_0
        pl.BlockSpec((H, 4 * H), const2),                    # W1_hh bf16 (resident)
        pl.BlockSpec((H, 4 * H), const2),                    # W2_ih bf16 (resident)
        pl.BlockSpec((H, 4 * H), const2),                    # W2_hh bf16 (resident)
        pl.BlockSpec((1, 4 * H), const2),                    # b2
        pl.BlockSpec((1, H), const2),                        # wl row
        pl.BlockSpec((1, 1), const2),                        # bl
    ]
    out_specs = (
        pl.BlockSpec((tc, B), lambda t: (t, 0)),             # per-chunk output block
        pl.BlockSpec((B, H), const2),                        # h1 carry/out (resident)
        pl.BlockSpec((B, H), const2),
        pl.BlockSpec((B, H), const2),
        pl.BlockSpec((B, H), const2),
    )
    return pl.pallas_call(
        functools.partial(rudder_seq_kernel, time_chunk=tc),
        out_shape=out_shapes,
        grid=(T // tc,),
        in_specs=in_specs,
        out_specs=out_specs,
        scratch_shapes=[pltpu.VMEM((tc, B, H), jnp.float32)],   # per-chunk h2 history
        compiler_params=pltpu.CompilerParams(
            dimension_semantics=("arbitrary",)),               # sequential: h/c carry
    )(*inputs)


# ----------------------------------------------------------------------------
# Parameter construction (PyTorch-style uniform init bounds) and host-side
# folding/packing.
# ----------------------------------------------------------------------------
def init_params(key, hidden_size=128, head_output_size=16,
                lstm_input_size=42, action_input_size=2,
                state_input_size=13, time_input_size=21):
    ks = list(jax.random.split(key, 16))

    def linear(k, fan_in, fan_out):
        kw, kb = jax.random.split(k)
        bound = 1.0 / (fan_in ** 0.5)
        W = jax.random.uniform(kw, (fan_in, fan_out), jnp.float32, -bound, bound)
        b = jax.random.uniform(kb, (1, fan_out), jnp.float32, -bound, bound)
        return W, b

    def lstm(k, in_size, H):
        k1, k2, k3, k4 = jax.random.split(k, 4)
        bound = 1.0 / (H ** 0.5)
        w_ih = jax.random.uniform(k1, (in_size, 4 * H), jnp.float32, -bound, bound)
        w_hh = jax.random.uniform(k2, (H, 4 * H), jnp.float32, -bound, bound)
        b_ih = jax.random.uniform(k3, (1, 4 * H), jnp.float32, -bound, bound)
        b_hh = jax.random.uniform(k4, (1, 4 * H), jnp.float32, -bound, bound)
        return w_ih, w_hh, b_ih, b_hh

    wa, ba = linear(ks[0], action_input_size, head_output_size)
    ws, bs = linear(ks[1], state_input_size, head_output_size)
    wt, bt = linear(ks[2], time_input_size, head_output_size)
    wrr, brr = linear(ks[3], head_output_size * 3, lstm_input_size)
    w1i, w1h, b1i, b1h = lstm(ks[4], lstm_input_size, hidden_size)
    w2i, w2h, b2i, b2h = lstm(ks[5], hidden_size, hidden_size)
    wl, bl = linear(ks[6], hidden_size, 1)

    return (wa, ba, ws, bs, wt, bt, wrr, brr,
            w1i, w1h, b1i, b1h, w2i, w2h, b2i, b2h, wl, bl)


def pack_params(params):
    """Fold heads+rr into the LSTM1 input weight (f32), pre-sum biases, and
    produce bf16 recurrent weights (split for the sequence kernel, fused for
    the single-step kernel)."""
    (wa, ba, ws, bs, wt, bt, wrr, brr,
     w1i, w1h, b1i, b1h, w2i, w2h, b2i, b2h, wl, bl) = params
    head = wa.shape[1]
    H = w1h.shape[0]

    # xt = [a,s,t] @ Wfold + bfold  (exact decomposition of cat + rr layer)
    wrr_a, wrr_s, wrr_t = wrr[:head], wrr[head:2 * head], wrr[2 * head:3 * head]
    wfold = jnp.concatenate([wa @ wrr_a, ws @ wrr_s, wt @ wrr_t], axis=0)  # [36, 42]
    bfold = ba @ wrr_a + bs @ wrr_s + bt @ wrr_t + brr                     # [1, 42]

    # Fold straight into the LSTM1 input weight; pre-sum all LSTM1-side biases.
    w1x = wfold @ w1i                                                      # [36, 4H] f32
    b1_all = bfold @ w1i + b1i + b1h                                       # [1, 4H]  f32
    b2_all = b2i + b2h                                                     # [1, 4H]  f32

    # Fused packed forms for the single-step kernel.
    w1x_pad = jnp.pad(w1x, ((0, H - w1x.shape[0]), (0, 0)))                # [H, 4H]
    w1_step = jnp.concatenate([w1x_pad, w1h], axis=0).astype(jnp.bfloat16)  # [2H, 4H]
    w2_step = jnp.concatenate([w2i, w2h], axis=0).astype(jnp.bfloat16)      # [2H, 4H]

    return dict(
        w1x=w1x,                                  # f32, used host-side (gates_x precompute)
        b1=b1_all,
        w1hh=w1h.astype(jnp.bfloat16),
        w2ih=w2i.astype(jnp.bfloat16),
        w2hh=w2h.astype(jnp.bfloat16),
        b2=b2_all,
        wl=wl.T,                                  # [1, H]
        bl=bl,                                    # [1, 1]
        w1_step=w1_step,
        w2_step=w2_step,
    )


# ----------------------------------------------------------------------------
# References.
# ----------------------------------------------------------------------------
def reference_forward(params, action_hot, state_hot, time_tri, h1, c1, h2, c2):
    """Pure-JAX f32 replica of the original PyTorch module forward."""
    (wa, ba, ws, bs, wt, bt, wrr, brr,
     w1i, w1h, b1i, b1h, w2i, w2h, b2i, b2h, wl, bl) = params
    H = h1.shape[1]

    ao = action_hot @ wa + ba
    so = state_hot @ ws + bs
    to = time_tri @ wt + bt
    xt = jnp.concatenate([ao, so, to], axis=-1) @ wrr + brr

    def cell(x, h, c, wih, whh, bih, bhh):
        g = x @ wih + bih + h @ whh + bhh
        i, f, gg, o = _gate_split(g, H)
        c_new = f * c + i * gg
        return o * jnp.tanh(c_new), c_new

    h1_t, c1_t = cell(xt, h1, c1, w1i, w1h, b1i, b1h)
    h2_t, c2_t = cell(h1_t, h2, c2, w2i, w2h, b2i, b2h)
    out = h2_t @ wl + bl
    return out, h1_t, c1_t, h2_t, c2_t


def step_reference_packed(packed, x36, h1, c1, h2, c2):
    """Mirrors the single-step kernel math (bf16 fused weights / matmul inputs)."""
    H = h1.shape[1]
    w1f = packed["w1_step"].astype(jnp.float32)
    w2f = packed["w2_step"].astype(jnp.float32)
    xpad = jnp.pad(x36, ((0, 0), (0, H - x36.shape[1])))

    def cell(xcat, c, wf, b):
        xq = xcat.astype(jnp.bfloat16).astype(jnp.float32)
        g = xq @ wf + b
        i, f, gg, o = _gate_split(g, H)
        c_new = f * c + i * gg
        return o * jnp.tanh(c_new), c_new

    h1_t, c1_t = cell(jnp.concatenate([xpad, h1], axis=-1), c1, w1f, packed["b1"])
    h2_t, c2_t = cell(jnp.concatenate([h1_t, h2], axis=-1), c2, w2f, packed["b2"])
    out = jnp.sum(h2_t * packed["wl"], axis=-1, keepdims=True) + packed["bl"]
    return out, h1_t, c1_t, h2_t, c2_t


def seq_reference_packed(packed, gx_seq, h1, c1, h2, c2):
    """Mirrors the sequence-kernel math (f32 x-path, bf16 recurrent matmuls)."""
    H = h1.shape[1]
    w1hh = packed["w1hh"].astype(jnp.float32)
    w2ih = packed["w2ih"].astype(jnp.float32)
    w2hh = packed["w2hh"].astype(jnp.float32)
    bf = lambda v: v.astype(jnp.bfloat16).astype(jnp.float32)

    outs = []
    for t in range(gx_seq.shape[0]):
        g1 = gx_seq[t] + bf(h1) @ w1hh
        i1, f1, gg1, o1 = _gate_split(g1, H)
        c1 = f1 * c1 + i1 * gg1
        h1 = o1 * jnp.tanh(c1)

        g2 = bf(h2) @ w2hh + packed["b2"] + bf(h1) @ w2ih
        i2, f2, gg2, o2 = _gate_split(g2, H)
        c2 = f2 * c2 + i2 * gg2
        h2 = o2 * jnp.tanh(c2)

        outs.append(jnp.sum(h2 * packed["wl"], axis=-1) + packed["bl"][0, 0])
    return jnp.stack(outs, axis=0), h1, c1, h2, c2


# ----------------------------------------------------------------------------
if __name__ == "__main__":
    B, H, T = 2, 128, 32
    ACTION_IN, STATE_IN, TIME_IN = 2, 13, 21

    key = jax.random.PRNGKey(0)
    (k_param, k_a, k_s, k_t, k_h1, k_c1, k_h2, k_c2,
     k_as, k_ss, k_ts) = jax.random.split(key, 11)

    params = init_params(k_param, hidden_size=H)
    packed = pack_params(params)

    action_hot = jax.random.normal(k_a, (B, ACTION_IN), jnp.float32)
    state_hot = jax.random.normal(k_s, (B, STATE_IN), jnp.float32)
    time_tri = jax.random.normal(k_t, (B, TIME_IN), jnp.float32)
    h1 = jax.random.normal(k_h1, (B, H), jnp.float32)
    c1 = jax.random.normal(k_c1, (B, H), jnp.float32)
    h2 = jax.random.normal(k_h2, (B, H), jnp.float32)
    c2 = jax.random.normal(k_c2, (B, H), jnp.float32)

    # ---- single-step kernel (exact module semantics) -----------------------
    step_fn = jax.jit(functools.partial(rudder_lstm_forward, packed))
    outs = jax.block_until_ready(
        step_fn(action_hot, state_hot, time_tri, h1, c1, h2, c2))

    x36 = jnp.concatenate([action_hot, state_hot, time_tri], axis=-1)
    tight_ref = step_reference_packed(packed, x36, h1, c1, h2, c2)
    f32_ref = reference_forward(params, action_hot, state_hot, time_tri, h1, c1, h2, c2)
    for got, want in zip(outs, tight_ref):
        assert got.shape == want.shape and got.dtype == want.dtype
        assert jnp.allclose(got, want, atol=1e-3, rtol=1e-3), "step mismatch (packed ref)"
    for got, want in zip(outs, f32_ref):
        # bf16 weights -> relaxed tolerance vs. the full-f32 module reference.
        assert jnp.allclose(got, want, atol=5e-2, rtol=5e-2), "step mismatch (f32 ref)"

    # ---- full-sequence kernel (chunked time loop in one pallas_call) -------
    action_seq = jax.random.normal(k_as, (T, B, ACTION_IN), jnp.float32)
    state_seq = jax.random.normal(k_ss, (T, B, STATE_IN), jnp.float32)
    time_seq = jax.random.normal(k_ts, (T, B, TIME_IN), jnp.float32)

    seq_fn = jax.jit(functools.partial(rudder_lstm_sequence, packed))
    seq_outs = jax.block_until_ready(
        seq_fn(action_seq, state_seq, time_seq, h1, c1, h2, c2))

    gx_seq = _precompute_gates_x(packed, action_seq, state_seq, time_seq)
    out_ref_seq, h1r, c1r, h2r, c2r = seq_reference_packed(packed, gx_seq, h1, c1, h2, c2)

    assert seq_outs[0].shape == (T, B)
    assert jnp.allclose(seq_outs[0], out_ref_seq, atol=5e-3, rtol=5e-3), "seq output mismatch"
    for got, want in zip(seq_outs[1:], (h1r, c1r, h2r, c2r)):
        assert got.shape == want.shape
        assert jnp.allclose(got, want, atol=5e-3, rtol=5e-3), "seq state mismatch"

    print("KERNEL_OK")
</pallas_src>

<mosaic_0001>
module attributes {stable_mosaic.version = 11 : i64} {
  func.func @rudder_step_kernel(%arg0: memref<2x128xf32, #tpu.memory_space<vmem>>, %arg1: memref<2x128xf32, #tpu.memory_space<vmem>>, %arg2: memref<2x128xf32, #tpu.memory_space<vmem>>, %arg3: memref<2x128xf32, #tpu.memory_space<vmem>>, %arg4: memref<2x128xf32, #tpu.memory_space<vmem>>, %arg5: memref<256x512xbf16, #tpu.memory_space<vmem>>, %arg6: memref<1x512xf32, #tpu.memory_space<vmem>>, %arg7: memref<256x512xbf16, #tpu.memory_space<vmem>>, %arg8: memref<1x512xf32, #tpu.memory_space<vmem>>, %arg9: memref<1x128xf32, #tpu.memory_space<vmem>>, %arg10: memref<1x1xf32, #tpu.memory_space<vmem>>, %arg11: memref<2x1xf32, #tpu.memory_space<vmem>>, %arg12: memref<2x128xf32, #tpu.memory_space<vmem>>, %arg13: memref<2x128xf32, #tpu.memory_space<vmem>>, %arg14: memref<2x128xf32, #tpu.memory_space<vmem>>, %arg15: memref<2x128xf32, #tpu.memory_space<vmem>>) attributes {dimension_semantics = [], scalar_prefetch = 0 : i64, scratch_operands = 0 : i64, tpu.core_type = #tpu.core_type<tc>} {
    %c0 = arith.constant 0 : index
    %c0_0 = arith.constant 0 : index
    %0 = vector.load %arg0[%c0, %c0_0] : memref<2x128xf32, #tpu.memory_space<vmem>>, vector<2x128xf32>
    %c0_1 = arith.constant 0 : index
    %c0_2 = arith.constant 0 : index
    %1 = vector.load %arg1[%c0_1, %c0_2] : memref<2x128xf32, #tpu.memory_space<vmem>>, vector<2x128xf32>
    %2 = tpu.concatenate %0, %1 in 1 : vector<2x128xf32>, vector<2x128xf32> -> vector<2x256xf32>
    %3 = arith.truncf %2 : vector<2x256xf32> to vector<2x256xbf16>
    %c0_3 = arith.constant 0 : index
    %c0_4 = arith.constant 0 : index
    %4 = vector.load %arg2[%c0_3, %c0_4] : memref<2x128xf32, #tpu.memory_space<vmem>>, vector<2x128xf32>
    %c0_5 = arith.constant 0 : index
    %c0_6 = arith.constant 0 : index
    %5 = vector.load %arg5[%c0_5, %c0_6] : memref<256x512xbf16, #tpu.memory_space<vmem>>, vector<256x512xbf16>
    %cst = arith.constant dense<0.000000e+00> : vector<2x512xf32>
    %6 = tpu.matmul %3, %5, %cst {dimension_numbers = #tpu.dot_dimension_numbers<[1], [0], [0], [1], [0, 0, 1, 1], [], []>} : vector<2x256xbf16>, vector<256x512xbf16>, vector<2x512xf32> -> vector<2x512xf32>
    %c0_7 = arith.constant 0 : index
    %c0_8 = arith.constant 0 : index
    %7 = vector.load %arg6[%c0_7, %c0_8] : memref<1x512xf32, #tpu.memory_space<vmem>>, vector<1x512xf32>
    %8 = vector.broadcast %7 : vector<1x512xf32> to vector<2x512xf32>
    %9 = arith.addf %6, %8 : vector<2x512xf32>
    %10 = vector.extract_strided_slice %9 {offsets = [0, 0], sizes = [2, 128], strides = [1, 1]} : vector<2x512xf32> to vector<2x128xf32>
    %11 = arith.negf %10 : vector<2x128xf32>
    %12 = math.exp %11 : vector<2x128xf32>
    %cst_9 = arith.constant 1.000000e+00 : f32
    %13 = vector.broadcast %cst_9 : f32 to vector<2x128xf32>
    %14 = arith.addf %13, %12 : vector<2x128xf32>
    %15 = arith.divf %13, %14 : vector<2x128xf32>
    %16 = vector.extract_strided_slice %9 {offsets = [0, 128], sizes = [2, 128], strides = [1, 1]} : vector<2x512xf32> to vector<2x128xf32>
    %17 = arith.negf %16 : vector<2x128xf32>
    %18 = math.exp %17 : vector<2x128xf32>
    %cst_10 = arith.constant 1.000000e+00 : f32
    %19 = vector.broadcast %cst_10 : f32 to vector<2x128xf32>
    %20 = arith.addf %19, %18 : vector<2x128xf32>
    %21 = arith.divf %19, %20 : vector<2x128xf32>
    %22 = vector.extract_strided_slice %9 {offsets = [0, 256], sizes = [2, 128], strides = [1, 1]} : vector<2x512xf32> to vector<2x128xf32>
    %23 = math.tanh %22 : vector<2x128xf32>
    %24 = vector.extract_strided_slice %9 {offsets = [0, 384], sizes = [2, 128], strides = [1, 1]} : vector<2x512xf32> to vector<2x128xf32>
    %25 = arith.negf %24 : vector<2x128xf32>
    %26 = math.exp %25 : vector<2x128xf32>
    %cst_11 = arith.constant 1.000000e+00 : f32
    %27 = vector.broadcast %cst_11 : f32 to vector<2x128xf32>
    %28 = arith.addf %27, %26 : vector<2x128xf32>
    %29 = arith.divf %27, %28 : vector<2x128xf32>
    %30 = arith.mulf %21, %4 : vector<2x128xf32>
    %31 = arith.mulf %15, %23 : vector<2x128xf32>
    %32 = arith.addf %30, %31 : vector<2x128xf32>
    %33 = math.tanh %32 : vector<2x128xf32>
    %34 = arith.mulf %29, %33 : vector<2x128xf32>
    %c0_12 = arith.constant 0 : index
    %c0_13 = arith.constant 0 : index
    %35 = vector.load %arg3[%c0_12, %c0_13] : memref<2x128xf32, #tpu.memory_space<vmem>>, vector<2x128xf32>
    %36 = tpu.concatenate %34, %35 in 1 : vector<2x128xf32>, vector<2x128xf32> -> vector<2x256xf32>
    %37 = arith.truncf %36 : vector<2x256xf32> to vector<2x256xbf16>
    %c0_14 = arith.constant 0 : index
    %c0_15 = arith.constant 0 : index
    %38 = vector.load %arg4[%c0_14, %c0_15] : memref<2x128xf32, #tpu.memory_space<vmem>>, vector<2x128xf32>
    %c0_16 = arith.constant 0 : index
    %c0_17 = arith.constant 0 : index
    %39 = vector.load %arg7[%c0_16, %c0_17] : memref<256x512xbf16, #tpu.memory_space<vmem>>, vector<256x512xbf16>
    %cst_18 = arith.constant dense<0.000000e+00> : vector<2x512xf32>
    %40 = tpu.matmul %37, %39, %cst_18 {dimension_numbers = #tpu.dot_dimension_numbers<[1], [0], [0], [1], [0, 0, 1, 1], [], []>} : vector<2x256xbf16>, vector<256x512xbf16>, vector<2x512xf32> -> vector<2x512xf32>
    %c0_19 = arith.constant 0 : index
    %c0_20 = arith.constant 0 : index
    %41 = vector.load %arg8[%c0_19, %c0_20] : memref<1x512xf32, #tpu.memory_space<vmem>>, vector<1x512xf32>
    %42 = vector.broadcast %41 : vector<1x512xf32> to vector<2x512xf32>
    %43 = arith.addf %40, %42 : vector<2x512xf32>
    %44 = vector.extract_strided_slice %43 {offsets = [0, 0], sizes = [2, 128], strides = [1, 1]} : vector<2x512xf32> to vector<2x128xf32>
    %45 = arith.negf %44 : vector<2x128xf32>
    %46 = math.exp %45 : vector<2x128xf32>
    %cst_21 = arith.constant 1.000000e+00 : f32
    %47 = vector.broadcast %cst_21 : f32 to vector<2x128xf32>
    %48 = arith.addf %47, %46 : vector<2x128xf32>
    %49 = arith.divf %47, %48 : vector<2x128xf32>
    %50 = vector.extract_strided_slice %43 {offsets = [0, 128], sizes = [2, 128], strides = [1, 1]} : vector<2x512xf32> to vector<2x128xf32>
    %51 = arith.negf %50 : vector<2x128xf32>
    %52 = math.exp %51 : vector<2x128xf32>
    %cst_22 = arith.constant 1.000000e+00 : f32
    %53 = vector.broadcast %cst_22 : f32 to vector<2x128xf32>
    %54 = arith.addf %53, %52 : vector<2x128xf32>
    %55 = arith.divf %53, %54 : vector<2x128xf32>
    %56 = vector.extract_strided_slice %43 {offsets = [0, 256], sizes = [2, 128], strides = [1, 1]} : vector<2x512xf32> to vector<2x128xf32>
    %57 = math.tanh %56 : vector<2x128xf32>
    %58 = vector.extract_strided_slice %43 {offsets = [0, 384], sizes = [2, 128], strides = [1, 1]} : vector<2x512xf32> to vector<2x128xf32>
    %59 = arith.negf %58 : vector<2x128xf32>
    %60 = math.exp %59 : vector<2x128xf32>
    %cst_23 = arith.constant 1.000000e+00 : f32
    %61 = vector.broadcast %cst_23 : f32 to vector<2x128xf32>
    %62 = arith.addf %61, %60 : vector<2x128xf32>
    %63 = arith.divf %61, %62 : vector<2x128xf32>
    %64 = arith.mulf %55, %38 : vector<2x128xf32>
    %65 = arith.mulf %49, %57 : vector<2x128xf32>
    %66 = arith.addf %64, %65 : vector<2x128xf32>
    %67 = math.tanh %66 : vector<2x128xf32>
    %68 = arith.mulf %63, %67 : vector<2x128xf32>
    %c0_24 = arith.constant 0 : index
    %c0_25 = arith.constant 0 : index
    %69 = vector.load %arg9[%c0_24, %c0_25] : memref<1x128xf32, #tpu.memory_space<vmem>>, vector<1x128xf32>
    %70 = vector.broadcast %69 : vector<1x128xf32> to vector<2x128xf32>
    %71 = arith.mulf %68, %70 : vector<2x128xf32>
    %cst_26 = arith.constant dense<0.000000e+00> : vector<2xf32>
    %72 = vector.multi_reduction <add>, %71, %cst_26 [1] : vector<2x128xf32> to vector<2xf32>
    %73 = vector.shape_cast %72 : vector<2xf32> to vector<2x1xf32>
    %c0_27 = arith.constant 0 : index
    %c0_28 = arith.constant 0 : index
    %74 = vector.load %arg10[%c0_27, %c0_28] : memref<1x1xf32, #tpu.memory_space<vmem>>, vector<1x1xf32>
    %75 = vector.broadcast %74 : vector<1x1xf32> to vector<2x1xf32>
    %76 = arith.addf %73, %75 : vector<2x1xf32>
    %c0_29 = arith.constant 0 : index
    %c0_30 = arith.constant 0 : index
    %77 = vector.load %arg11[%c0_29, %c0_30] : memref<2x1xf32, #tpu.memory_space<vmem>>, vector<2x1xf32>
    tpu.vector_store %arg11[%c0_29, %c0_30], %76 {strides = array<i32>} : memref<2x1xf32, #tpu.memory_space<vmem>>, vector<2x1xf32>,
    %c0_31 = arith.constant 0 : index
    %c0_32 = arith.constant 0 : index
    %78 = vector.load %arg12[%c0_31, %c0_32] : memref<2x128xf32, #tpu.memory_space<vmem>>, vector<2x128xf32>
    tpu.vector_store %arg12[%c0_31, %c0_32], %34 {strides = array<i32>} : memref<2x128xf32, #tpu.memory_space<vmem>>, vector<2x128xf32>,
    %c0_33 = arith.constant 0 : index
    %c0_34 = arith.constant 0 : index
    %79 = vector.load %arg13[%c0_33, %c0_34] : memref<2x128xf32, #tpu.memory_space<vmem>>, vector<2x128xf32>
    tpu.vector_store %arg13[%c0_33, %c0_34], %32 {strides = array<i32>} : memref<2x128xf32, #tpu.memory_space<vmem>>, vector<2x128xf32>,
    %c0_35 = arith.constant 0 : index
    %c0_36 = arith.constant 0 : index
    %80 = vector.load %arg14[%c0_35, %c0_36] : memref<2x128xf32, #tpu.memory_space<vmem>>, vector<2x128xf32>
    tpu.vector_store %arg14[%c0_35, %c0_36], %68 {strides = array<i32>} : memref<2x128xf32, #tpu.memory_space<vmem>>, vector<2x128xf32>,
    %c0_37 = arith.constant 0 : index
    %c0_38 = arith.constant 0 : index
    %81 = vector.load %arg15[%c0_37, %c0_38] : memref<2x128xf32, #tpu.memory_space<vmem>>, vector<2x128xf32>
    tpu.vector_store %arg15[%c0_37, %c0_38], %66 {strides = array<i32>} : memref<2x128xf32, #tpu.memory_space<vmem>>, vector<2x128xf32>,
    return
  }
}

</mosaic_0001>

<llo_original>
// kernel: rudder_lstm_forward.1
$region0: #{rudder_lstm_forward.1}
  #allocation0 [shape = 'u32[]', space=smem, size = 0x4, offset = 0x4, fixed_abs, tag = 'smem constant byte address 0x4 - core index']
  #allocation1 [shape = 'u32[144,128]{1,0:T(1,128)}', space=vmem, size = 0x12000, scoped, tag = 'internal scratch']
  #allocation2 [shape = 'f32[1,1]{1,0:T(1,128)S(1)}', space=vmem, size = 0x200, scoped, tag = 'scoped memory for rudder_lstm_forward.1']
  %s0 = inlined_call_operand.vmem [shape: f32[2,128], index: 0, kind: input, shape index: {}]
  %s1 = inlined_call_operand.vmem [shape: f32[2,128], index: 1, kind: input, shape index: {}]
  %s2 = inlined_call_operand.vmem [shape: f32[2,128], index: 2, kind: input, shape index: {}]
  %s3 = inlined_call_operand.vmem [shape: f32[2,128], index: 3, kind: input, shape index: {}]
  %s4 = inlined_call_operand.vmem [shape: f32[2,128], index: 4, kind: input, shape index: {}]
  %s5 = inlined_call_operand.vmem [shape: bf16[256,512], index: 5, kind: input, shape index: {}]
  %s6 = inlined_call_operand.vmem [shape: f32[1,512], index: 6, kind: input, shape index: {}]
  %s7 = inlined_call_operand.vmem [shape: bf16[256,512], index: 7, kind: input, shape index: {}]
  %s8 = inlined_call_operand.vmem [shape: f32[1,512], index: 8, kind: input, shape index: {}]
  %s9 = inlined_call_operand.vmem [shape: f32[1,128], index: 9, kind: input, shape index: {}]
  %s10 = inlined_call_operand.<no memory space> [shape: f32[1,1], index: 10, kind: input, shape index: {}]
  %s11 = inlined_call_operand.vmem [shape: f32[2,1], index: 11, kind: output, shape index: {0}]
  %s12 = inlined_call_operand.hbm [shape: f32[2,128], index: 12, kind: output, shape index: {1}]
  %s13 = inlined_call_operand.hbm [shape: f32[2,128], index: 13, kind: output, shape index: {2}]
  %s14 = inlined_call_operand.hbm [shape: f32[2,128], index: 14, kind: output, shape index: {3}]
  %s15 = inlined_call_operand.hbm [shape: f32[2,128], index: 15, kind: output, shape index: {4}]
  %16 = xla_tuple %s11, %s12, %s13, %s14, %s15
  %s17 = sld [smem:[#allocation0]]
  $region86: #{rudder_lstm_forward.1} parent=0
    _
  %s19 = ssub.s32 1, %s17
  %s20 = scalar_select 0, %s19, %s17
  %v21 = vstv %s10
  %22 = vst [vmem:[#allocation2] sm:$0x1] %v21
  $region1: #{rudder_lstm_forward.1} parent=0
    #allocation3 [shape = 'u8[1024]{0}', space=vmem, size = 0x400, scoped, tag = 'output window, operand 1, single buffered']
    #allocation4 [shape = 's32[1]{0}', space=sflag, size = 0x4, scoped, tag = 'scoped memory for rudder_lstm_forward.1']
    #allocation5 [shape = 'u8[1024]{0}', space=vmem, size = 0x400, scoped, tag = 'output window, operand 2, single buffered']
    #allocation6 [shape = 's32[1]{0}', space=sflag, size = 0x4, scoped, tag = 'scoped memory for rudder_lstm_forward.1']
    #allocation7 [shape = 'u8[1024]{0}', space=vmem, size = 0x400, scoped, tag = 'output window, operand 3, single buffered']
    #allocation8 [shape = 'u8[1024]{0}', space=vmem, size = 0x400, scoped, tag = 'output window, operand 4, single buffered']
    #allocation9 [shape = 's32[1]{0}', space=sflag, size = 0x4, scoped, tag = 'scoped memory for rudder_lstm_forward.1']
    %23 = vsyncpa [#allocation4], 0
    %24 = vsyncpa [#allocation6], 0
    %25 = vsyncpa [#allocation9], 0
    // Predicated region
    $region2: #{rudder_lstm_forward.1} parent=1 // pred_check
      _
    $region3: #{rudder_lstm_forward.1} parent=1 // pred_check_branch
      %27 = sbr.rel (0) target = $region5
    $region4: #{rudder_lstm_forward.1} parent=1 // pred_region
      _
    $region5: #{rudder_lstm_forward.1} parent=1 // pred_fallthru
      _
    // Predicated region
    $region6: #{rudder_lstm_forward.1} parent=1 // pred_check
      _
    $region7: #{rudder_lstm_forward.1} parent=1 // pred_check_branch
      %29 = sbr.rel (0) target = $region9
    $region8: #{rudder_lstm_forward.1} parent=1 // pred_region
      _
    $region9: #{rudder_lstm_forward.1} parent=1 // pred_fallthru
      _
    // Predicated region
    $region10: #{rudder_lstm_forward.1} parent=1 // pred_check
      _
    $region11: #{rudder_lstm_forward.1} parent=1 // pred_check_branch
      %31 = sbr.rel (0) target = $region13
    $region12: #{rudder_lstm_forward.1} parent=1 // pred_region
      _
    $region13: #{rudder_lstm_forward.1} parent=1 // pred_fallthru
      _
    // Predicated region
    $region14: #{rudder_lstm_forward.1} parent=1 // pred_check
      _
    $region15: #{rudder_lstm_forward.1} parent=1 // pred_check_branch
      %33 = sbr.rel (0) target = $region17
    $region16: #{rudder_lstm_forward.1} parent=1 // pred_region
      _
    $region17: #{rudder_lstm_forward.1} parent=1 // pred_fallthru
      _
    // Predicated region
    $region18: #{rudder_lstm_forward.1} parent=1 // pred_check
      _
    $region19: #{rudder_lstm_forward.1} parent=1 // pred_check_branch
      %35 = sbr.rel (0) target = $region21
    $region20: #{rudder_lstm_forward.1} parent=1 // pred_region
      _
    $region21: #{rudder_lstm_forward.1} parent=1 // pred_fallthru
      _
    // Predicated region
    $region22: #{rudder_lstm_forward.1} parent=1 // pred_check
      _
    $region23: #{rudder_lstm_forward.1} parent=1 // pred_check_branch
      %37 = sbr.rel (0) target = $region25
    $region24: #{rudder_lstm_forward.1} parent=1 // pred_region
      _
    $region25: #{rudder_lstm_forward.1} parent=1 // pred_fallthru
      _
    // Predicated region
    $region26: #{rudder_lstm_forward.1} parent=1 // pred_check
      _
    $region27: #{rudder_lstm_forward.1} parent=1 // pred_check_branch
      %39 = sbr.rel (0) target = $region29
    $region28: #{rudder_lstm_forward.1} parent=1 // pred_region
      _
    $region29: #{rudder_lstm_forward.1} parent=1 // pred_fallthru
      _
    // Predicated region
    $region30: #{rudder_lstm_forward.1} parent=1 // pred_check
      _
    $region31: #{rudder_lstm_forward.1} parent=1 // pred_check_branch
      %41 = sbr.rel (0) target = $region33
    $region32: #{rudder_lstm_forward.1} parent=1 // pred_region
      _
    $region33: #{rudder_lstm_forward.1} parent=1 // pred_fallthru
      _
    // Predicated region
    $region34: #{rudder_lstm_forward.1} parent=1 // pred_check
      _
    $region35: #{rudder_lstm_forward.1} parent=1 // pred_check_branch
      %43 = sbr.rel (0) target = $region37
    $region36: #{rudder_lstm_forward.1} parent=1 // pred_region
      _
    $region37: #{rudder_lstm_forward.1} parent=1 // pred_fallthru
      _
    // Predicated region
    $region38: #{rudder_lstm_forward.1} parent=1 // pred_check
      _
    $region39: #{rudder_lstm_forward.1} parent=1 // pred_check_branch
      %45 = sbr.rel (0) target = $region41
    $region40: #{rudder_lstm_forward.1} parent=1 // pred_region
      _
    $region41: #{rudder_lstm_forward.1} parent=1 // pred_fallthru
      _
    // Predicated region
    $region42: #{rudder_lstm_forward.1} parent=1 // pred_check
      _
    $region43: #{rudder_lstm_forward.1} parent=1 // pred_check_branch
      %47 = sbr.rel (0) target = $region45
    $region44: #{rudder_lstm_forward.1} parent=1 // pred_region
      _
    $region45: #{rudder_lstm_forward.1} parent=1 // pred_fallthru
      _
    %v48 = vld [vmem:[%s0] sm:$0x3]
    %v49 = vld [vmem:[%s1] sm:$0x3]
    %v50 = vpack.c.bf16 %v48, %v48
    %v51 = vpack.c.bf16 %v49, %v49
    %v52 = vld [vmem:[%s2] sm:$0x3]
    %v53 = vld [vmem:[%s5] sm:$0xff]
    %v54 = vld [vmem:[%s5 + $0x8] sm:$0xff]
    %v55 = vld [vmem:[%s5 + $0x10] sm:$0xff]
    %v56 = vld [vmem:[%s5 + $0x18] sm:$0xff]
    %v57 = vld [vmem:[%s5 + $0x20] sm:$0xff]
    %v58 = vld [vmem:[%s5 + $0x28] sm:$0xff]
    %v59 = vld [vmem:[%s5 + $0x30] sm:$0xff]
    %v60 = vld [vmem:[%s5 + $0x38] sm:$0xff]
    %v61 = vld [vmem:[%s5 + $0x40] sm:$0xff]
    %v62 = vld [vmem:[%s5 + $0x48] sm:$0xff]
    %v63 = vld [vmem:[%s5 + $0x50] sm:$0xff]
    %v64 = vld [vmem:[%s5 + $0x58] sm:$0xff]
    %v65 = vld [vmem:[%s5 + $0x60] sm:$0xff]
    %v66 = vld [vmem:[%s5 + $0x68] sm:$0xff]
    %v67 = vld [vmem:[%s5 + $0x70] sm:$0xff]
    %v68 = vld [vmem:[%s5 + $0x78] sm:$0xff]
    %v69 = vld [vmem:[%s5 + $0x80] sm:$0xff]
    %v70 = vld [vmem:[%s5 + $0x88] sm:$0xff]
    %v71 = vld [vmem:[%s5 + $0x90] sm:$0xff]
    %v72 = vld [vmem:[%s5 + $0x98] sm:$0xff]
    %v73 = vld [vmem:[%s5 + $0xa0] sm:$0xff]
    %v74 = vld [vmem:[%s5 + $0xa8] sm:$0xff]
    %v75 = vld [vmem:[%s5 + $0xb0] sm:$0xff]
    %v76 = vld [vmem:[%s5 + $0xb8] sm:$0xff]
    %v77 = vld [vmem:[%s5 + $0xc0] sm:$0xff]
    %v78 = vld [vmem:[%s5 + $0xc8] sm:$0xff]
    %v79 = vld [vmem:[%s5 + $0xd0] sm:$0xff]
    %v80 = vld [vmem:[%s5 + $0xd8] sm:$0xff]
    %v81 = vld [vmem:[%s5 + $0xe0] sm:$0xff]
    %v82 = vld [vmem:[%s5 + $0xe8] sm:$0xff]
    %v83 = vld [vmem:[%s5 + $0xf0] sm:$0xff]
    %v84 = vld [vmem:[%s5 + $0xf8] sm:$0xff]
    %v85 = vld [vmem:[%s5 + $0x100] sm:$0xff]
    %v86 = vld [vmem:[%s5 + $0x108] sm:$0xff]
    %v87 = vld [vmem:[%s5 + $0x110] sm:$0xff]
    %v88 = vld [vmem:[%s5 + $0x118] sm:$0xff]
    %v89 = vld [vmem:[%s5 + $0x120] sm:$0xff]
    %v90 = vld [vmem:[%s5 + $0x128] sm:$0xff]
    %v91 = vld [vmem:[%s5 + $0x130] sm:$0xff]
    %v92 = vld [vmem:[%s5 + $0x138] sm:$0xff]
    %v93 = vld [vmem:[%s5 + $0x140] sm:$0xff]
    %v94 = vld [vmem:[%s5 + $0x148] sm:$0xff]
    %v95 = vld [vmem:[%s5 + $0x150] sm:$0xff]
    %v96 = vld [vmem:[%s5 + $0x158] sm:$0xff]
    %v97 = vld [vmem:[%s5 + $0x160] sm:$0xff]
    %v98 = vld [vmem:[%s5 + $0x168] sm:$0xff]
    %v99 = vld [vmem:[%s5 + $0x170] sm:$0xff]
    %v100 = vld [vmem:[%s5 + $0x178] sm:$0xff]
    %v101 = vld [vmem:[%s5 + $0x180] sm:$0xff]
    %v102 = vld [vmem:[%s5 + $0x188] sm:$0xff]
    %v103 = vld [vmem:[%s5 + $0x190] sm:$0xff]
    %v104 = vld [vmem:[%s5 + $0x198] sm:$0xff]
    %v105 = vld [vmem:[%s5 + $0x1a0] sm:$0xff]
    %v106 = vld [vmem:[%s5 + $0x1a8] sm:$0xff]
    %v107 = vld [vmem:[%s5 + $0x1b0] sm:$0xff]
    %v108 = vld [vmem:[%s5 + $0x1b8] sm:$0xff]
    %v109 = vld [vmem:[%s5 + $0x1c0] sm:$0xff]
    %v110 = vld [vmem:[%s5 + $0x1c8] sm:$0xff]
    %v111 = vld [vmem:[%s5 + $0x1d0] sm:$0xff]
    %v112 = vld [vmem:[%s5 + $0x1d8] sm:$0xff]
    %v113 = vld [vmem:[%s5 + $0x1e0] sm:$0xff]
    %v114 = vld [vmem:[%s5 + $0x1e8] sm:$0xff]
    %v115 = vld [vmem:[%s5 + $0x1f0] sm:$0xff]
    %v116 = vld [vmem:[%s5 + $0x1f8] sm:$0xff]
    %v117 = vld [vmem:[%s6] sm:$0xf]
    %v119 = vlaneseq
    %v120 = vshrl.u32 %v119, 7
    %v121 = vsub.s32 0, %v120
    %v122 = vrot.slane %v117, %v121
    %v123 = vlaneseq
    %v124 = vshrl.u32 %v123, 7
    %v125 = vsub.s32 1, %v124
    %v126 = vrot.slane %v117, %v125
    %v127 = vlaneseq
    %v128 = vshrl.u32 %v127, 7
    %v129 = vsub.s32 2, %v128
    %v130 = vrot.slane %v117, %v129
    %v131 = vlaneseq
    %v132 = vshrl.u32 %v131, 7
    %v133 = vsub.s32 3, %v132
    %v134 = vrot.slane %v117, %v133
    %v203 = vunpack.c.l.b16 %v53
    %v204 = vunpack.c.h.b16 %v53
    %v205 = vunpack.c.l.b16 %v54
    %v206 = vunpack.c.h.b16 %v54
    %v207 = vunpack.c.l.b16 %v55
    %v208 = vunpack.c.h.b16 %v55
    %v209 = vunpack.c.l.b16 %v56
    %v210 = vunpack.c.h.b16 %v56
    %v211 = vunpack.c.l.b16 %v57
    %v212 = vunpack.c.h.b16 %v57
    %v213 = vunpack.c.l.b16 %v58
    %v214 = vunpack.c.h.b16 %v58
    %v215 = vunpack.c.l.b16 %v59
    %v216 = vunpack.c.h.b16 %v59
    %v217 = vunpack.c.l.b16 %v60
    %v218 = vunpack.c.h.b16 %v60
    %v219 = vunpack.c.l.b16 %v61
    %v220 = vunpack.c.h.b16 %v61
    %v221 = vunpack.c.l.b16 %v62
    %v222 = vunpack.c.h.b16 %v62
    %v223 = vunpack.c.l.b16 %v63
    %v224 = vunpack.c.h.b16 %v63
    %v225 = vunpack.c.l.b16 %v64
    %v226 = vunpack.c.h.b16 %v64
    %v227 = vunpack.c.l.b16 %v65
    %v228 = vunpack.c.h.b16 %v65
    %v229 = vunpack.c.l.b16 %v66
    %v230 = vunpack.c.h.b16 %v66
    %v231 = vunpack.c.l.b16 %v67
    %v232 = vunpack.c.h.b16 %v67
    %v233 = vunpack.c.l.b16 %v68
    %v234 = vunpack.c.h.b16 %v68
    %v235 = vunpack.c.l.b16 %v69
    %v236 = vunpack.c.h.b16 %v69
    %v237 = vunpack.c.l.b16 %v70
    %v238 = vunpack.c.h.b16 %v70
    %v239 = vunpack.c.l.b16 %v71
    %v240 = vunpack.c.h.b16 %v71
    %v241 = vunpack.c.l.b16 %v72
    %v242 = vunpack.c.h.b16 %v72
    %v243 = vunpack.c.l.b16 %v73
    %v244 = vunpack.c.h.b16 %v73
    %v245 = vunpack.c.l.b16 %v74
    %v246 = vunpack.c.h.b16 %v74
    %v247 = vunpack.c.l.b16 %v75
    %v248 = vunpack.c.h.b16 %v75
    %v249 = vunpack.c.l.b16 %v76
    %v250 = vunpack.c.h.b16 %v76
    %v251 = vunpack.c.l.b16 %v77
    %v252 = vunpack.c.h.b16 %v77
    %v253 = vunpack.c.l.b16 %v78
    %v254 = vunpack.c.h.b16 %v78
    %v255 = vunpack.c.l.b16 %v79
    %v256 = vunpack.c.h.b16 %v79
    %v257 = vunpack.c.l.b16 %v80
    %v258 = vunpack.c.h.b16 %v80
    %v259 = vunpack.c.l.b16 %v81
    %v260 = vunpack.c.h.b16 %v81
    %v261 = vunpack.c.l.b16 %v82
    %v262 = vunpack.c.h.b16 %v82
    %v263 = vunpack.c.l.b16 %v83
    %v264 = vunpack.c.h.b16 %v83
    %v265 = vunpack.c.l.b16 %v84
    %v266 = vunpack.c.h.b16 %v84
    %v267 = vunpack.c.l.b16 %v85
    %v268 = vunpack.c.h.b16 %v85
    %v269 = vunpack.c.l.b16 %v86
    %v270 = vunpack.c.h.b16 %v86
    %v271 = vunpack.c.l.b16 %v87
    %v272 = vunpack.c.h.b16 %v87
    %v273 = vunpack.c.l.b16 %v88
    %v274 = vunpack.c.h.b16 %v88
    %v275 = vunpack.c.l.b16 %v89
    %v276 = vunpack.c.h.b16 %v89
    %v277 = vunpack.c.l.b16 %v90
    %v278 = vunpack.c.h.b16 %v90
    %v279 = vunpack.c.l.b16 %v91
    %v280 = vunpack.c.h.b16 %v91
    %v281 = vunpack.c.l.b16 %v92
    %v282 = vunpack.c.h.b16 %v92
    %v283 = vunpack.c.l.b16 %v93
    %v284 = vunpack.c.h.b16 %v93
    %v285 = vunpack.c.l.b16 %v94
    %v286 = vunpack.c.h.b16 %v94
    %v287 = vunpack.c.l.b16 %v95
    %v288 = vunpack.c.h.b16 %v95
    %v289 = vunpack.c.l.b16 %v96
    %v290 = vunpack.c.h.b16 %v96
    %v291 = vunpack.c.l.b16 %v97
    %v292 = vunpack.c.h.b16 %v97
    %v293 = vunpack.c.l.b16 %v98
    %v294 = vunpack.c.h.b16 %v98
    %v295 = vunpack.c.l.b16 %v99
    %v296 = vunpack.c.h.b16 %v99
    %v297 = vunpack.c.l.b16 %v100
    %v298 = vunpack.c.h.b16 %v100
    %v299 = vunpack.c.l.b16 %v101
    %v300 = vunpack.c.h.b16 %v101
    %v301 = vunpack.c.l.b16 %v102
    %v302 = vunpack.c.h.b16 %v102
    %v303 = vunpack.c.l.b16 %v103
    %v304 = vunpack.c.h.b16 %v103
    %v305 = vunpack.c.l.b16 %v104
    %v306 = vunpack.c.h.b16 %v104
    %v307 = vunpack.c.l.b16 %v105
    %v308 = vunpack.c.h.b16 %v105
    %v309 = vunpack.c.l.b16 %v106
    %v310 = vunpack.c.h.b16 %v106
    %v311 = vunpack.c.l.b16 %v107
    %v312 = vunpack.c.h.b16 %v107
    %v313 = vunpack.c.l.b16 %v108
    %v314 = vunpack.c.h.b16 %v108
    %v315 = vunpack.c.l.b16 %v109
    %v316 = vunpack.c.h.b16 %v109
    %v317 = vunpack.c.l.b16 %v110
    %v318 = vunpack.c.h.b16 %v110
    %v319 = vunpack.c.l.b16 %v111
    %v320 = vunpack.c.h.b16 %v111
    %v321 = vunpack.c.l.b16 %v112
    %v322 = vunpack.c.h.b16 %v112
    %v323 = vunpack.c.l.b16 %v113
    %v324 = vunpack.c.h.b16 %v113
    %v325 = vunpack.c.l.b16 %v114
    %v326 = vunpack.c.h.b16 %v114
    %v327 = vunpack.c.l.b16 %v115
    %v328 = vunpack.c.h.b16 %v115
    %v329 = vunpack.c.l.b16 %v116
    %v330 = vunpack.c.h.b16 %v116
    %v331 = vpack.c.b16 %v207, %v203
    %v332 = vpack.c.b16 %v208, %v204
    %v333 = vpack.c.b16 %v209, %v205
    %v334 = vpack.c.b16 %v210, %v206
    %v335 = vpack.c.b16 %v215, %v211
    %v336 = vpack.c.b16 %v216, %v212
    %v337 = vpack.c.b16 %v217, %v213
    %v338 = vpack.c.b16 %v218, %v214
    %v339 = vpack.c.b16 %v223, %v219
    %v340 = vpack.c.b16 %v224, %v220
    %v341 = vpack.c.b16 %v225, %v221
    %v342 = vpack.c.b16 %v226, %v222
    %v343 = vpack.c.b16 %v231, %v227
    %v344 = vpack.c.b16 %v232, %v228
    %v345 = vpack.c.b16 %v233, %v229
    %v346 = vpack.c.b16 %v234, %v230
    %v347 = vpack.c.b16 %v239, %v235
    %v348 = vpack.c.b16 %v240, %v236
    %v349 = vpack.c.b16 %v241, %v237
    %v350 = vpack.c.b16 %v242, %v238
    %v351 = vpack.c.b16 %v247, %v243
    %v352 = vpack.c.b16 %v248, %v244
    %v353 = vpack.c.b16 %v249, %v245
    %v354 = vpack.c.b16 %v250, %v246
    %v355 = vpack.c.b16 %v255, %v251
    %v356 = vpack.c.b16 %v256, %v252
    %v357 = vpack.c.b16 %v257, %v253
    %v358 = vpack.c.b16 %v258, %v254
    %v359 = vpack.c.b16 %v263, %v259
    %v360 = vpack.c.b16 %v264, %v260
    %v361 = vpack.c.b16 %v265, %v261
    %v362 = vpack.c.b16 %v266, %v262
    %v363 = vpack.c.b16 %v271, %v267
    %v364 = vpack.c.b16 %v272, %v268
    %v365 = vpack.c.b16 %v273, %v269
    %v366 = vpack.c.b16 %v274, %v270
    %v367 = vpack.c.b16 %v279, %v275
    %v368 = vpack.c.b16 %v280, %v276
    %v369 = vpack.c.b16 %v281, %v277
    %v370 = vpack.c.b16 %v282, %v278
    %v371 = vpack.c.b16 %v287, %v283
    %v372 = vpack.c.b16 %v288, %v284
    %v373 = vpack.c.b16 %v289, %v285
    %v374 = vpack.c.b16 %v290, %v286
    %v375 = vpack.c.b16 %v295, %v291
    %v376 = vpack.c.b16 %v296, %v292
    %v377 = vpack.c.b16 %v297, %v293
    %v378 = vpack.c.b16 %v298, %v294
    %v379 = vpack.c.b16 %v303, %v299
    %v380 = vpack.c.b16 %v304, %v300
    %v381 = vpack.c.b16 %v305, %v301
    %v382 = vpack.c.b16 %v306, %v302
    %v383 = vpack.c.b16 %v311, %v307
    %v384 = vpack.c.b16 %v312, %v308
    %v385 = vpack.c.b16 %v313, %v309
    %v386 = vpack.c.b16 %v314, %v310
    %v387 = vpack.c.b16 %v319, %v315
    %v388 = vpack.c.b16 %v320, %v316
    %v389 = vpack.c.b16 %v321, %v317
    %v390 = vpack.c.b16 %v322, %v318
    %v391 = vpack.c.b16 %v327, %v323
    %v392 = vpack.c.b16 %v328, %v324
    %v393 = vpack.c.b16 %v329, %v325
    %v394 = vpack.c.b16 %v330, %v326
    %459 = vmatprep.subr.bf16.mxu0 %v332
    %460 = vmatpush1.bf16.msra.mxu0 %v331
    %461 = vmatprep.subr.bf16.mxu0 %v336
    %462 = vmatpush1.bf16.msra.mxu0 %v335
    %463 = vmatprep.subr.bf16.mxu0 %v340
    %464 = vmatpush1.bf16.msra.mxu0 %v339
    %465 = vmatprep.subr.bf16.mxu0 %v344
    %466 = vmatpush1.bf16.msra.mxu0 %v343
    %467 = vmatprep.subr.bf16.mxu0 %v348
    %468 = vmatpush1.bf16.msra.mxu0 %v347
    %469 = vmatprep.subr.bf16.mxu0 %v352
    %470 = vmatpush1.bf16.msra.mxu0 %v351
    %471 = vmatprep.subr.bf16.mxu0 %v356
    %472 = vmatpush1.bf16.msra.mxu0 %v355
    %473 = vmatprep.subr.bf16.mxu0 %v360
    %474 = vmatpush1.bf16.msra.mxu0 %v359
    %475 = vmatprep.subr.bf16.mxu0 %v364
    %476 = vmatpush1.bf16.msra.mxu0 %v363
    %477 = vmatprep.subr.bf16.mxu0 %v368
    %478 = vmatpush1.bf16.msra.mxu0 %v367
    %479 = vmatprep.subr.bf16.mxu0 %v372
    %480 = vmatpush1.bf16.msra.mxu0 %v371
    %481 = vmatprep.subr.bf16.mxu0 %v376
    %482 = vmatpush1.bf16.msra.mxu0 %v375
    %483 = vmatprep.subr.bf16.mxu0 %v380
    %484 = vmatpush1.bf16.msra.mxu0 %v379
    %485 = vmatprep.subr.bf16.mxu0 %v384
    %486 = vmatpush1.bf16.msra.mxu0 %v383
    %487 = vmatprep.subr.bf16.mxu0 %v388
    %488 = vmatpush1.bf16.msra.mxu0 %v387
    %489 = vmatprep.subr.bf16.mxu0 %v392
    %490 = vmatpush1.bf16.msra.mxu0 %v391
    %491 = vmatprep.mubr.bf16.mxu0 %v51
    %492 = vmatmul.mubr.bf16.gmra.mrb[0].mxu0 %v50
    %v493 = vpop.f32.mrb[0].mxu0
    %v494 = vadd.f32 %v122, %v493
    %v495 = vpop.f32.mrb[0].mxu0
    %v496 = vadd.f32 %v126, %v495
    %v497 = vpop.f32.mrb[0].mxu0
    %v498 = vpop.f32.mrb[0].mxu0
    %499 = vdwg.mxu0
    %500 = vmatprep.subr.bf16.mxu0 %v334
    %501 = vmatpush1.bf16.msra.mxu0 %v333
    %502 = vmatprep.subr.bf16.mxu0 %v338
    %503 = vmatpush1.bf16.msra.mxu0 %v337
    %504 = vmatprep.subr.bf16.mxu0 %v342
    %505 = vmatpush1.bf16.msra.mxu0 %v341
    %506 = vmatprep.subr.bf16.mxu0 %v346
    %507 = vmatpush1.bf16.msra.mxu0 %v345
    %508 = vmatprep.subr.bf16.mxu0 %v350
    %509 = vmatpush1.bf16.msra.mxu0 %v349
    %510 = vmatprep.subr.bf16.mxu0 %v354
    %511 = vmatpush1.bf16.msra.mxu0 %v353
    %512 = vmatprep.subr.bf16.mxu0 %v358
    %513 = vmatpush1.bf16.msra.mxu0 %v357
    %514 = vmatprep.subr.bf16.mxu0 %v362
    %515 = vmatpush1.bf16.msra.mxu0 %v361
    %516 = vmatprep.subr.bf16.mxu0 %v366
    %517 = vmatpush1.bf16.msra.mxu0 %v365
    %518 = vmatprep.subr.bf16.mxu0 %v370
    %519 = vmatpush1.bf16.msra.mxu0 %v369
    %520 = vmatprep.subr.bf16.mxu0 %v374
    %521 = vmatpush1.bf16.msra.mxu0 %v373
    %522 = vmatprep.subr.bf16.mxu0 %v378
    %523 = vmatpush1.bf16.msra.mxu0 %v377
    %524 = vmatprep.subr.bf16.mxu0 %v382
    %525 = vmatpush1.bf16.msra.mxu0 %v381
    %526 = vmatprep.subr.bf16.mxu0 %v386
    %527 = vmatpush1.bf16.msra.mxu0 %v385
    %528 = vmatprep.subr.bf16.mxu0 %v390
    %529 = vmatpush1.bf16.msra.mxu0 %v389
    %530 = vmatprep.subr.bf16.mxu0 %v394
    %531 = vmatpush1.bf16.msra.mxu0 %v393
    %532 = vmatprep.mubr.bf16.mxu0 %v51
    %533 = vmatmul.mubr.bf16.gmra.mrb[0].mxu0 %v50
    %v534 = vpop.f32.mrb[0].mxu0
    %v535 = vadd.f32 %v130, %v534
    %v536 = vpop.f32.mrb[0].mxu0
    %v537 = vadd.f32 %v134, %v536
    %v538 = vpop.f32.mrb[0].mxu0
    %v539 = vpop.f32.mrb[0].mxu0
    %540 = vdwg.mxu0
    %v541 = vxor.u32 %v494, 2147483648
    %v542 = vmul.f32 %v541, 1.442695
    %v543 = vpow.pop %v542
    %v544 = vadd.f32 %v543, 1.0
    %v545 = vrcp.pop %v544
    %v546 = vmul.f32 1.0, %v545
    %v547 = vxor.u32 %v496, 2147483648
    %v548 = vmul.f32 %v547, 1.442695
    %v549 = vpow.pop %v548
    %v550 = vadd.f32 %v549, 1.0
    %v551 = vrcp.pop %v550
    %v552 = vmul.f32 1.0, %v551
    %v553 = vtanh.pop %v535
    %v554 = vxor.u32 %v537, 2147483648
    %v555 = vmul.f32 %v554, 1.442695
    %v556 = vpow.pop %v555
    %v557 = vadd.f32 %v556, 1.0
    %v558 = vrcp.pop %v557
    %v559 = vmul.f32 1.0, %v558
    %v560 = vmul.f32 %v552, %v52
    %v561 = vmul.f32 %v546, %v553
    %v562 = vadd.f32 %v560, %v561
    %v563 = vtanh.pop %v562
    %v564 = vmul.f32 %v559, %v563
    %v565 = vld [vmem:[%s3] sm:$0x3]
    %v566 = vpack.c.bf16 %v564, %v564
    %v567 = vpack.c.bf16 %v565, %v565
    %v568 = vld [vmem:[%s4] sm:$0x3]
    %v569 = vld [vmem:[%s7] sm:$0xff]
    %v570 = vld [vmem:[%s7 + $0x8] sm:$0xff]
    %v571 = vld [vmem:[%s7 + $0x10] sm:$0xff]
    %v572 = vld [vmem:[%s7 + $0x18] sm:$0xff]
    %v573 = vld [vmem:[%s7 + $0x20] sm:$0xff]
    %v574 = vld [vmem:[%s7 + $0x28] sm:$0xff]
    %v575 = vld [vmem:[%s7 + $0x30] sm:$0xff]
    %v576 = vld [vmem:[%s7 + $0x38] sm:$0xff]
    %v577 = vld [vmem:[%s7 + $0x40] sm:$0xff]
    %v578 = vld [vmem:[%s7 + $0x48] sm:$0xff]
    %v579 = vld [vmem:[%s7 + $0x50] sm:$0xff]
    %v580 = vld [vmem:[%s7 + $0x58] sm:$0xff]
    %v581 = vld [vmem:[%s7 + $0x60] sm:$0xff]
    %v582 = vld [vmem:[%s7 + $0x68] sm:$0xff]
    %v583 = vld [vmem:[%s7 + $0x70] sm:$0xff]
    %v584 = vld [vmem:[%s7 + $0x78] sm:$0xff]
    %v585 = vld [vmem:[%s7 + $0x80] sm:$0xff]
    %v586 = vld [vmem:[%s7 + $0x88] sm:$0xff]
    %v587 = vld [vmem:[%s7 + $0x90] sm:$0xff]
    %v588 = vld [vmem:[%s7 + $0x98] sm:$0xff]
    %v589 = vld [vmem:[%s7 + $0xa0] sm:$0xff]
    %v590 = vld [vmem:[%s7 + $0xa8] sm:$0xff]
    %v591 = vld [vmem:[%s7 + $0xb0] sm:$0xff]
    %v592 = vld [vmem:[%s7 + $0xb8] sm:$0xff]
    %v593 = vld [vmem:[%s7 + $0xc0] sm:$0xff]
    %v594 = vld [vmem:[%s7 + $0xc8] sm:$0xff]
    %v595 = vld [vmem:[%s7 + $0xd0] sm:$0xff]
    %v596 = vld [vmem:[%s7 + $0xd8] sm:$0xff]
    %v597 = vld [vmem:[%s7 + $0xe0] sm:$0xff]
    %v598 = vld [vmem:[%s7 + $0xe8] sm:$0xff]
    %v599 = vld [vmem:[%s7 + $0xf0] sm:$0xff]
    %v600 = vld [vmem:[%s7 + $0xf8] sm:$0xff]
    %v601 = vld [vmem:[%s7 + $0x100] sm:$0xff]
    %v602 = vld [vmem:[%s7 + $0x108] sm:$0xff]
    %v603 = vld [vmem:[%s7 + $0x110] sm:$0xff]
    %v604 = vld [vmem:[%s7 + $0x118] sm:$0xff]
    %v605 = vld [vmem:[%s7 + $0x120] sm:$0xff]
    %v606 = vld [vmem:[%s7 + $0x128] sm:$0xff]
    %v607 = vld [vmem:[%s7 + $0x130] sm:$0xff]
    %v608 = vld [vmem:[%s7 + $0x138] sm:$0xff]
    %v609 = vld [vmem:[%s7 + $0x140] sm:$0xff]
    %v610 = vld [vmem:[%s7 + $0x148] sm:$0xff]
    %v611 = vld [vmem:[%s7 + $0x150] sm:$0xff]
    %v612 = vld [vmem:[%s7 + $0x158] sm:$0xff]
    %v613 = vld [vmem:[%s7 + $0x160] sm:$0xff]
    %v614 = vld [vmem:[%s7 + $0x168] sm:$0xff]
    %v615 = vld [vmem:[%s7 + $0x170] sm:$0xff]
    %v616 = vld [vmem:[%s7 + $0x178] sm:$0xff]
    %v617 = vld [vmem:[%s7 + $0x180] sm:$0xff]
    %v618 = vld [vmem:[%s7 + $0x188] sm:$0xff]
    %v619 = vld [vmem:[%s7 + $0x190] sm:$0xff]
    %v620 = vld [vmem:[%s7 + $0x198] sm:$0xff]
    %v621 = vld [vmem:[%s7 + $0x1a0] sm:$0xff]
    %v622 = vld [vmem:[%s7 + $0x1a8] sm:$0xff]
    %v623 = vld [vmem:[%s7 + $0x1b0] sm:$0xff]
    %v624 = vld [vmem:[%s7 + $0x1b8] sm:$0xff]
    %v625 = vld [vmem:[%s7 + $0x1c0] sm:$0xff]
    %v626 = vld [vmem:[%s7 + $0x1c8] sm:$0xff]
    %v627 = vld [vmem:[%s7 + $0x1d0] sm:$0xff]
    %v628 = vld [vmem:[%s7 + $0x1d8] sm:$0xff]
    %v629 = vld [vmem:[%s7 + $0x1e0] sm:$0xff]
    %v630 = vld [vmem:[%s7 + $0x1e8] sm:$0xff]
    %v631 = vld [vmem:[%s7 + $0x1f0] sm:$0xff]
    %v632 = vld [vmem:[%s7 + $0x1f8] sm:$0xff]
    %v633 = vld [vmem:[%s8] sm:$0xf]
    %v635 = vlaneseq
    %v636 = vshrl.u32 %v635, 7
    %v637 = vsub.s32 0, %v636
    %v638 = vrot.slane %v633, %v637
    %v639 = vlaneseq
    %v640 = vshrl.u32 %v639, 7
    %v641 = vsub.s32 1, %v640
    %v642 = vrot.slane %v633, %v641
    %v643 = vlaneseq
    %v644 = vshrl.u32 %v643, 7
    %v645 = vsub.s32 2, %v644
    %v646 = vrot.slane %v633, %v645
    %v647 = vlaneseq
    %v648 = vshrl.u32 %v647, 7
    %v649 = vsub.s32 3, %v648
    %v650 = vrot.slane %v633, %v649
    %v719 = vunpack.c.l.b16 %v569
    %v720 = vunpack.c.h.b16 %v569
    %v721 = vunpack.c.l.b16 %v570
    %v722 = vunpack.c.h.b16 %v570
    %v723 = vunpack.c.l.b16 %v571
    %v724 = vunpack.c.h.b16 %v571
    %v725 = vunpack.c.l.b16 %v572
    %v726 = vunpack.c.h.b16 %v572
    %v727 = vunpack.c.l.b16 %v573
    %v728 = vunpack.c.h.b16 %v573
    %v729 = vunpack.c.l.b16 %v574
    %v730 = vunpack.c.h.b16 %v574
    %v731 = vunpack.c.l.b16 %v575
    %v732 = vunpack.c.h.b16 %v575
    %v733 = vunpack.c.l.b16 %v576
    %v734 = vunpack.c.h.b16 %v576
    %v735 = vunpack.c.l.b16 %v577
    %v736 = vunpack.c.h.b16 %v577
    %v737 = vunpack.c.l.b16 %v578
    %v738 = vunpack.c.h.b16 %v578
    %v739 = vunpack.c.l.b16 %v579
    %v740 = vunpack.c.h.b16 %v579
    %v741 = vunpack.c.l.b16 %v580
    %v742 = vunpack.c.h.b16 %v580
    %v743 = vunpack.c.l.b16 %v581
    %v744 = vunpack.c.h.b16 %v581
    %v745 = vunpack.c.l.b16 %v582
    %v746 = vunpack.c.h.b16 %v582
    %v747 = vunpack.c.l.b16 %v583
    %v748 = vunpack.c.h.b16 %v583
    %v749 = vunpack.c.l.b16 %v584
    %v750 = vunpack.c.h.b16 %v584
    %v751 = vunpack.c.l.b16 %v585
    %v752 = vunpack.c.h.b16 %v585
    %v753 = vunpack.c.l.b16 %v586
    %v754 = vunpack.c.h.b16 %v586
    %v755 = vunpack.c.l.b16 %v587
    %v756 = vunpack.c.h.b16 %v587
    %v757 = vunpack.c.l.b16 %v588
    %v758 = vunpack.c.h.b16 %v588
    %v759 = vunpack.c.l.b16 %v589
    %v760 = vunpack.c.h.b16 %v589
    %v761 = vunpack.c.l.b16 %v590
    %v762 = vunpack.c.h.b16 %v590
    %v763 = vunpack.c.l.b16 %v591
    %v764 = vunpack.c.h.b16 %v591
    %v765 = vunpack.c.l.b16 %v592
    %v766 = vunpack.c.h.b16 %v592
    %v767 = vunpack.c.l.b16 %v593
    %v768 = vunpack.c.h.b16 %v593
    %v769 = vunpack.c.l.b16 %v594
    %v770 = vunpack.c.h.b16 %v594
    %v771 = vunpack.c.l.b16 %v595
    %v772 = vunpack.c.h.b16 %v595
    %v773 = vunpack.c.l.b16 %v596
    %v774 = vunpack.c.h.b16 %v596
    %v775 = vunpack.c.l.b16 %v597
    %v776 = vunpack.c.h.b16 %v597
    %v777 = vunpack.c.l.b16 %v598
    %v778 = vunpack.c.h.b16 %v598
    %v779 = vunpack.c.l.b16 %v599
    %v780 = vunpack.c.h.b16 %v599
    %v781 = vunpack.c.l.b16 %v600
    %v782 = vunpack.c.h.b16 %v600
    %v783 = vunpack.c.l.b16 %v601
    %v784 = vunpack.c.h.b16 %v601
    %v785 = vunpack.c.l.b16 %v602
    %v786 = vunpack.c.h.b16 %v602
    %v787 = vunpack.c.l.b16 %v603
    %v788 = vunpack.c.h.b16 %v603
    %v789 = vunpack.c.l.b16 %v604
    %v790 = vunpack.c.h.b16 %v604
    %v791 = vunpack.c.l.b16 %v605
    %v792 = vunpack.c.h.b16 %v605
    %v793 = vunpack.c.l.b16 %v606
    %v794 = vunpack.c.h.b16 %v606
    %v795 = vunpack.c.l.b16 %v607
    %v796 = vunpack.c.h.b16 %v607
    %v797 = vunpack.c.l.b16 %v608
    %v798 = vunpack.c.h.b16 %v608
    %v799 = vunpack.c.l.b16 %v609
    %v800 = vunpack.c.h.b16 %v609
    %v801 = vunpack.c.l.b16 %v610
    %v802 = vunpack.c.h.b16 %v610
    %v803 = vunpack.c.l.b16 %v611
    %v804 = vunpack.c.h.b16 %v611
    %v805 = vunpack.c.l.b16 %v612
    %v806 = vunpack.c.h.b16 %v612
    %v807 = vunpack.c.l.b16 %v613
    %v808 = vunpack.c.h.b16 %v613
    %v809 = vunpack.c.l.b16 %v614
    %v810 = vunpack.c.h.b16 %v614
    %v811 = vunpack.c.l.b16 %v615
    %v812 = vunpack.c.h.b16 %v615
    %v813 = vunpack.c.l.b16 %v616
    %v814 = vunpack.c.h.b16 %v616
    %v815 = vunpack.c.l.b16 %v617
    %v816 = vunpack.c.h.b16 %v617
    %v817 = vunpack.c.l.b16 %v618
    %v818 = vunpack.c.h.b16 %v618
    %v819 = vunpack.c.l.b16 %v619
    %v820 = vunpack.c.h.b16 %v619
    %v821 = vunpack.c.l.b16 %v620
    %v822 = vunpack.c.h.b16 %v620
    %v823 = vunpack.c.l.b16 %v621
    %v824 = vunpack.c.h.b16 %v621
    %v825 = vunpack.c.l.b16 %v622
    %v826 = vunpack.c.h.b16 %v622
    %v827 = vunpack.c.l.b16 %v623
    %v828 = vunpack.c.h.b16 %v623
    %v829 = vunpack.c.l.b16 %v624
    %v830 = vunpack.c.h.b16 %v624
    %v831 = vunpack.c.l.b16 %v625
    %v832 = vunpack.c.h.b16 %v625
    %v833 = vunpack.c.l.b16 %v626
    %v834 = vunpack.c.h.b16 %v626
    %v835 = vunpack.c.l.b16 %v627
    %v836 = vunpack.c.h.b16 %v627
    %v837 = vunpack.c.l.b16 %v628
    %v838 = vunpack.c.h.b16 %v628
    %v839 = vunpack.c.l.b16 %v629
    %v840 = vunpack.c.h.b16 %v629
    %v841 = vunpack.c.l.b16 %v630
    %v842 = vunpack.c.h.b16 %v630
    %v843 = vunpack.c.l.b16 %v631
    %v844 = vunpack.c.h.b16 %v631
    %v845 = vunpack.c.l.b16 %v632
    %v846 = vunpack.c.h.b16 %v632
    %v847 = vpack.c.b16 %v723, %v719
    %v848 = vpack.c.b16 %v724, %v720
    %v849 = vpack.c.b16 %v725, %v721
    %v850 = vpack.c.b16 %v726, %v722
    %v851 = vpack.c.b16 %v731, %v727
    %v852 = vpack.c.b16 %v732, %v728
    %v853 = vpack.c.b16 %v733, %v729
    %v854 = vpack.c.b16 %v734, %v730
    %v855 = vpack.c.b16 %v739, %v735
    %v856 = vpack.c.b16 %v740, %v736
    %v857 = vpack.c.b16 %v741, %v737
    %v858 = vpack.c.b16 %v742, %v738
    %v859 = vpack.c.b16 %v747, %v743
    %v860 = vpack.c.b16 %v748, %v744
    %v861 = vpack.c.b16 %v749, %v745
    %v862 = vpack.c.b16 %v750, %v746
    %v863 = vpack.c.b16 %v755, %v751
    %v864 = vpack.c.b16 %v756, %v752
    %v865 = vpack.c.b16 %v757, %v753
    %v866 = vpack.c.b16 %v758, %v754
    %v867 = vpack.c.b16 %v763, %v759
    %v868 = vpack.c.b16 %v764, %v760
    %v869 = vpack.c.b16 %v765, %v761
    %v870 = vpack.c.b16 %v766, %v762
    %v871 = vpack.c.b16 %v771, %v767
    %v872 = vpack.c.b16 %v772, %v768
    %v873 = vpack.c.b16 %v773, %v769
    %v874 = vpack.c.b16 %v774, %v770
    %v875 = vpack.c.b16 %v779, %v775
    %v876 = vpack.c.b16 %v780, %v776
    %v877 = vpack.c.b16 %v781, %v777
    %v878 = vpack.c.b16 %v782, %v778
    %v879 = vpack.c.b16 %v787, %v783
    %v880 = vpack.c.b16 %v788, %v784
    %v881 = vpack.c.b16 %v789, %v785
    %v882 = vpack.c.b16 %v790, %v786
    %v883 = vpack.c.b16 %v795, %v791
    %v884 = vpack.c.b16 %v796, %v792
    %v885 = vpack.c.b16 %v797, %v793
    %v886 = vpack.c.b16 %v798, %v794
    %v887 = vpack.c.b16 %v803, %v799
    %v888 = vpack.c.b16 %v804, %v800
    %v889 = vpack.c.b16 %v805, %v801
    %v890 = vpack.c.b16 %v806, %v802
    %v891 = vpack.c.b16 %v811, %v807
    %v892 = vpack.c.b16 %v812, %v808
    %v893 = vpack.c.b16 %v813, %v809
    %v894 = vpack.c.b16 %v814, %v810
    %v895 = vpack.c.b16 %v819, %v815
    %v896 = vpack.c.b16 %v820, %v816
    %v897 = vpack.c.b16 %v821, %v817
    %v898 = vpack.c.b16 %v822, %v818
    %v899 = vpack.c.b16 %v827, %v823
    %v900 = vpack.c.b16 %v828, %v824
    %v901 = vpack.c.b16 %v829, %v825
    %v902 = vpack.c.b16 %v830, %v826
    %v903 = vpack.c.b16 %v835, %v831
    %v904 = vpack.c.b16 %v836, %v832
    %v905 = vpack.c.b16 %v837, %v833
    %v906 = vpack.c.b16 %v838, %v834
    %v907 = vpack.c.b16 %v843, %v839
    %v908 = vpack.c.b16 %v844, %v840
    %v909 = vpack.c.b16 %v845, %v841
    %v910 = vpack.c.b16 %v846, %v842
    %975 = vmatprep.subr.bf16.mxu0 %v848
    %976 = vmatpush1.bf16.msra.mxu0 %v847
    %977 = vmatprep.subr.bf16.mxu0 %v852
    %978 = vmatpush1.bf16.msra.mxu0 %v851
    %979 = vmatprep.subr.bf16.mxu0 %v856
    %980 = vmatpush1.bf16.msra.mxu0 %v855
    %981 = vmatprep.subr.bf16.mxu0 %v860
    %982 = vmatpush1.bf16.msra.mxu0 %v859
    %983 = vmatprep.subr.bf16.mxu0 %v864
    %984 = vmatpush1.bf16.msra.mxu0 %v863
    %985 = vmatprep.subr.bf16.mxu0 %v868
    %986 = vmatpush1.bf16.msra.mxu0 %v867
    %987 = vmatprep.subr.bf16.mxu0 %v872
    %988 = vmatpush1.bf16.msra.mxu0 %v871
    %989 = vmatprep.subr.bf16.mxu0 %v876
    %990 = vmatpush1.bf16.msra.mxu0 %v875
    %991 = vmatprep.subr.bf16.mxu0 %v880
    %992 = vmatpush1.bf16.msra.mxu0 %v879
    %993 = vmatprep.subr.bf16.mxu0 %v884
    %994 = vmatpush1.bf16.msra.mxu0 %v883
    %995 = vmatprep.subr.bf16.mxu0 %v888
    %996 = vmatpush1.bf16.msra.mxu0 %v887
    %997 = vmatprep.subr.bf16.mxu0 %v892
    %998 = vmatpush1.bf16.msra.mxu0 %v891
    %999 = vmatprep.subr.bf16.mxu0 %v896
    %1000 = vmatpush1.bf16.msra.mxu0 %v895
    %1001 = vmatprep.subr.bf16.mxu0 %v900
    %1002 = vmatpush1.bf16.msra.mxu0 %v899
    %1003 = vmatprep.subr.bf16.mxu0 %v904
    %1004 = vmatpush1.bf16.msra.mxu0 %v903
    %1005 = vmatprep.subr.bf16.mxu0 %v908
    %1006 = vmatpush1.bf16.msra.mxu0 %v907
    %1007 = vmatprep.mubr.bf16.mxu0 %v567
    %1008 = vmatmul.mubr.bf16.gmra.mrb[0].mxu0 %v566
    %v1009 = vpop.f32.mrb[0].mxu0
    %v1010 = vadd.f32 %v638, %v1009
    %v1011 = vpop.f32.mrb[0].mxu0
    %v1012 = vadd.f32 %v642, %v1011
    %v1013 = vpop.f32.mrb[0].mxu0
    %v1014 = vpop.f32.mrb[0].mxu0
    %1015 = vdwg.mxu0
    %1016 = vmatprep.subr.bf16.mxu0 %v850
    %1017 = vmatpush1.bf16.msra.mxu0 %v849
    %1018 = vmatprep.subr.bf16.mxu0 %v854
    %1019 = vmatpush1.bf16.msra.mxu0 %v853
    %1020 = vmatprep.subr.bf16.mxu0 %v858
    %1021 = vmatpush1.bf16.msra.mxu0 %v857
    %1022 = vmatprep.subr.bf16.mxu0 %v862
    %1023 = vmatpush1.bf16.msra.mxu0 %v861
    %1024 = vmatprep.subr.bf16.mxu0 %v866
    %1025 = vmatpush1.bf16.msra.mxu0 %v865
    %1026 = vmatprep.subr.bf16.mxu0 %v870
    %1027 = vmatpush1.bf16.msra.mxu0 %v869
    %1028 = vmatprep.subr.bf16.mxu0 %v874
    %1029 = vmatpush1.bf16.msra.mxu0 %v873
    %1030 = vmatprep.subr.bf16.mxu0 %v878
    %1031 = vmatpush1.bf16.msra.mxu0 %v877
    %1032 = vmatprep.subr.bf16.mxu0 %v882
    %1033 = vmatpush1.bf16.msra.mxu0 %v881
    %1034 = vmatprep.subr.bf16.mxu0 %v886
    %1035 = vmatpush1.bf16.msra.mxu0 %v885
    %1036 = vmatprep.subr.bf16.mxu0 %v890
    %1037 = vmatpush1.bf16.msra.mxu0 %v889
    %1038 = vmatprep.subr.bf16.mxu0 %v894
    %1039 = vmatpush1.bf16.msra.mxu0 %v893
    %1040 = vmatprep.subr.bf16.mxu0 %v898
    %1041 = vmatpush1.bf16.msra.mxu0 %v897
    %1042 = vmatprep.subr.bf16.mxu0 %v902
    %1043 = vmatpush1.bf16.msra.mxu0 %v901
    %1044 = vmatprep.subr.bf16.mxu0 %v906
    %1045 = vmatpush1.bf16.msra.mxu0 %v905
    %1046 = vmatprep.subr.bf16.mxu0 %v910
    %1047 = vmatpush1.bf16.msra.mxu0 %v909
    %1048 = vmatprep.mubr.bf16.mxu0 %v567
    %1049 = vmatmul.mubr.bf16.gmra.mrb[0].mxu0 %v566
    %v1050 = vpop.f32.mrb[0].mxu0
    %v1051 = vadd.f32 %v646, %v1050
    %v1052 = vpop.f32.mrb[0].mxu0
    %v1053 = vadd.f32 %v650, %v1052
    %v1054 = vpop.f32.mrb[0].mxu0
    %v1055 = vpop.f32.mrb[0].mxu0
    %1056 = vdwg.mxu0
    %v1057 = vxor.u32 %v1010, 2147483648
    %v1058 = vmul.f32 %v1057, 1.442695
    %v1059 = vpow.pop %v1058
    %v1060 = vadd.f32 %v1059, 1.0
    %v1061 = vrcp.pop %v1060
    %v1062 = vmul.f32 1.0, %v1061
    %v1063 = vxor.u32 %v1012, 2147483648
    %v1064 = vmul.f32 %v1063, 1.442695
    %v1065 = vpow.pop %v1064
    %v1066 = vadd.f32 %v1065, 1.0
    %v1067 = vrcp.pop %v1066
    %v1068 = vmul.f32 1.0, %v1067
    %v1069 = vtanh.pop %v1051
    %v1070 = vxor.u32 %v1053, 2147483648
    %v1071 = vmul.f32 %v1070, 1.442695
    %v1072 = vpow.pop %v1071
    %v1073 = vadd.f32 %v1072, 1.0
    %v1074 = vrcp.pop %v1073
    %v1075 = vmul.f32 1.0, %v1074
    %v1076 = vmul.f32 %v1068, %v568
    %v1077 = vmul.f32 %v1062, %v1069
    %v1078 = vadd.f32 %v1076, %v1077
    %v1079 = vtanh.pop %v1078
    %v1080 = vmul.f32 %v1075, %v1079
    %v1081 = vld [vmem:[%s9] sm:$0x1]
    %v1083 = vlaneseq
    %v1084 = vshrl.u32 %v1083, 7
    %v1085 = vsub.s32 0, %v1084
    %v1086 = vrot.slane %v1081, %v1085
    %v1088 = vmul.f32 %v1080, %v1086
    %vm1089 = vcmask 1041408
    %v1090 = vsel %vm1089, %v1088, 0.0
    %1091 = vadd.xlane.f32.xlu0 %v1090
    %v1092 = vpop.xlane.xlu0 %1091
    %v1093 = vld [vmem:[#allocation2] sm:$0x1]
    %v1095 = vlaneseq
    %v1096 = vshrl.u32 %v1095, 7
    %v1097 = vsub.s32 0, %v1096
    %v1098 = vrot.slane %v1093, %v1097
    %v1100 = vadd.f32 %v1092, %v1098
    %vm1101 = vcmask 1024
    %1102 = vst.msk [vmem:[%s11] sm:$0x3] %vm1101, %v1100
    %1103 = vst [vmem:[#allocation3] sm:$0x3] %v564
    %1104 = vst [vmem:[#allocation5] sm:$0x3] %v562
    %1105 = vst [vmem:[#allocation7] sm:$0x3] %v1080
    %1106 = vst [vmem:[#allocation8] sm:$0x3] %v1078
    // Predicated region
    $region46: #{rudder_lstm_forward.1} parent=1 // pred_check
      _
    $region47: #{rudder_lstm_forward.1} parent=1 // pred_check_branch
      %1108 = sbr.rel (0) target = $region49
    $region48: #{rudder_lstm_forward.1} parent=1 // pred_region
      _
    $region49: #{rudder_lstm_forward.1} parent=1 // pred_fallthru
      _
    // Predicated region
    $region50: #{rudder_lstm_forward.1} parent=1 // pred_check
      _
    $region51: #{rudder_lstm_forward.1} parent=1 // pred_check_branch
      %1110 = sbr.rel (0) target = $region53
    $region52: #{rudder_lstm_forward.1} parent=1 // pred_region
      %s1112 = ssub.s32 32, 32
      %1113 = vsyncadd [#allocation4], %s1112
      %s1115 = sshll.u32 [#allocation3], 4
      %s1116 = int_to_ptr.vmem [resolvable:$true] %s1115
      %1118 = dma.vmem_to_hbm [thread:$0]  %s1116, 32, %s12, [#allocation4]
    $region53: #{rudder_lstm_forward.1} parent=1 // pred_fallthru
      _
    // Predicated region
    $region54: #{rudder_lstm_forward.1} parent=1 // pred_check
      _
    $region55: #{rudder_lstm_forward.1} parent=1 // pred_check_branch
      %1120 = sbr.rel (0) target = $region57
    $region56: #{rudder_lstm_forward.1} parent=1 // pred_region
      %s1122 = ssub.s32 32, 32
      %1123 = vsyncadd [#allocation6], %s1122
      %s1125 = sshll.u32 [#allocation5], 4
      %s1126 = int_to_ptr.vmem [resolvable:$true] %s1125
      %1128 = dma.vmem_to_hbm [thread:$0]  %s1126, 32, %s13, [#allocation6]
    $region57: #{rudder_lstm_forward.1} parent=1 // pred_fallthru
      _
    // Predicated region
    $region58: #{rudder_lstm_forward.1} parent=1 // pred_check
      _
    $region59: #{rudder_lstm_forward.1} parent=1 // pred_check_branch
      %1130 = sbr.rel (0) target = $region61
    $region60: #{rudder_lstm_forward.1} parent=1 // pred_region
      %s1132 = ssub.s32 32, 32
      %1133 = vsyncadd [#allocation6], %s1132
      %s1135 = sshll.u32 [#allocation7], 4
      %s1136 = int_to_ptr.vmem [resolvable:$true] %s1135
      %1138 = dma.vmem_to_hbm [thread:$0]  %s1136, 32, %s14, [#allocation6]
    $region61: #{rudder_lstm_forward.1} parent=1 // pred_fallthru
      _
    // Predicated region
    $region62: #{rudder_lstm_forward.1} parent=1 // pred_check
      _
    $region63: #{rudder_lstm_forward.1} parent=1 // pred_check_branch
      %1140 = sbr.rel (0) target = $region65
    $region64: #{rudder_lstm_forward.1} parent=1 // pred_region
      %s1142 = ssub.s32 32, 32
      %1143 = vsyncadd [#allocation9], %s1142
      %s1145 = sshll.u32 [#allocation8], 4
      %s1146 = int_to_ptr.vmem [resolvable:$true] %s1145
      %1148 = dma.vmem_to_hbm [thread:$0]  %s1146, 32, %s15, [#allocation9]
    $region65: #{rudder_lstm_forward.1} parent=1 // pred_fallthru
      _
    // Predicated region
    $region66: #{rudder_lstm_forward.1} parent=1 // pred_check
      _
    $region67: #{rudder_lstm_forward.1} parent=1 // pred_check_branch
      %1150 = sbr.rel (0) target = $region69
    $region68: #{rudder_lstm_forward.1} parent=1 // pred_region
      _
    $region69: #{rudder_lstm_forward.1} parent=1 // pred_fallthru
      _
    // Predicated region
    $region70: #{rudder_lstm_forward.1} parent=1 // pred_check
      _
    $region71: #{rudder_lstm_forward.1} parent=1 // pred_check_branch
      %1152 = sbr.rel (0) target = $region73
    $region72: #{rudder_lstm_forward.1} parent=1 // pred_region
      %1153 = dma.done [#allocation4], 32
    $region73: #{rudder_lstm_forward.1} parent=1 // pred_fallthru
      _
    // Predicated region
    $region74: #{rudder_lstm_forward.1} parent=1 // pred_check
      _
    $region75: #{rudder_lstm_forward.1} parent=1 // pred_check_branch
      %1155 = sbr.rel (0) target = $region77
    $region76: #{rudder_lstm_forward.1} parent=1 // pred_region
      %1156 = dma.done [#allocation6], 32
    $region77: #{rudder_lstm_forward.1} parent=1 // pred_fallthru
      _
    // Predicated region
    $region78: #{rudder_lstm_forward.1} parent=1 // pred_check
      _
    $region79: #{rudder_lstm_forward.1} parent=1 // pred_check_branch
      %1158 = sbr.rel (0) target = $region81
    $region80: #{rudder_lstm_forward.1} parent=1 // pred_region
      %1159 = dma.done [#allocation6], 32
    $region81: #{rudder_lstm_forward.1} parent=1 // pred_fallthru
      _
    // Predicated region
    $region82: #{rudder_lstm_forward.1} parent=1 // pred_check
      _
    $region83: #{rudder_lstm_forward.1} parent=1 // pred_check_branch
      %1161 = sbr.rel (0) target = $region85
    $region84: #{rudder_lstm_forward.1} parent=1 // pred_region
      %1162 = dma.done [#allocation9], 32
    $region85: #{rudder_lstm_forward.1} parent=1 // pred_fallthru
      _
    %1163 = vsyncpa [#allocation4], 1
    %1164 = vsyncpa [#allocation6], 1
    %1165 = vsyncpa [#allocation9], 1

</llo_original>
